<compile_context>
chip_gen: v7x
topology: tpu7x:2x2x1
jax: 0.10.0
libtpu: 0.0.40
codegen_flags: <defaults>
</compile_context>

<pallas_src>
import functools

import jax
import jax.numpy as jnp
from jax.experimental import pallas as pl
from jax.experimental.pallas import tpu as pltpu

_LANE = 128       # lane width (last dim)
_SUB_BF16 = 16    # bf16 sublane width (second-to-last dim); also f32-safe


def _round_up(x, m):
    return ((x + m - 1) // m) * m


def _fused_mlp_kernel(x_ref, *refs, num_layers):
    """refs = (w1, b1, w2, b2, ..., wN, bN, o_ref); all tiles lane-dense.

    Weights are bf16 (MXU-native), activations/biases f32.  One MXU matmul per
    layer with f32 accumulation; bias folded into the accumulator; ReLU on the
    VPU after every hidden layer (not after the last Linear).
    """
    o_ref = refs[-1]
    wb = refs[:-1]
    h = x_ref[...]                                 # f32 activations
    for i in range(num_layers):
        w = wb[2 * i][...]                         # bf16 [din_p, dout_p]
        b = wb[2 * i + 1][...]                     # f32  [1,    dout_p]
        y = b + jnp.dot(h.astype(jnp.bfloat16), w,
                        preferred_element_type=jnp.float32)
        if i < num_layers - 1:
            y = jnp.maximum(y, 0.0)
        h = y
    o_ref[...] = h.astype(o_ref.dtype)


def prepare_mlp_params(params):
    """One-time prep: zero-pad feature dims to multiples of 128, cast weights
    to bf16 (biases stay f32, reshaped to (1, dout_p)).

    Returns (weights, biases, out_features).
    """
    weights, biases = [], []
    prev_p = _round_up(params[0][0].shape[0], _LANE)
    for (w, b) in params:
        din, dout = w.shape
        dout_p = _round_up(dout, _LANE)
        w_p = jnp.pad(w.astype(jnp.float32),
                      ((0, prev_p - din), (0, dout_p - dout))).astype(jnp.bfloat16)
        b_p = jnp.pad(b.astype(jnp.float32), (0, dout_p - dout)).reshape(1, dout_p)
        weights.append(w_p)
        biases.append(b_p)
        prev_p = dout_p
    return tuple(weights), tuple(biases), int(params[-1][0].shape[1])


@functools.partial(jax.jit, static_argnames=("out_features", "batch_tile"))
def _mlp_forward_impl(weights, biases, x, *, out_features, batch_tile):
    x = x.reshape(x.shape[0], -1).astype(jnp.float32)   # x.flatten(1)
    B, Din = x.shape
    n_layers = len(weights)
    Din_p = weights[0].shape[0]
    Dout_p = weights[-1].shape[1]

    # ---- batch tile: sublane-aligned, capped so v7x gets >= 2 grid steps ----
    TB = _round_up(min(batch_tile, B), _SUB_BF16)
    if B >= 2 * _SUB_BF16:
        TB = min(TB, _round_up(-(-B // 2), _SUB_BF16))
    Bp = _round_up(B, TB)

    # Only materialize a padded copy of x when strictly necessary (the jit
    # fuses this pad with the pallas_call when it does happen).
    if (Bp, Din_p) != (B, Din):
        x = jnp.pad(x, ((0, Bp - B), (0, Din_p - Din)))

    grid = (Bp // TB,)
    in_specs = [pl.BlockSpec((TB, Din_p), lambda i: (i, 0))]
    flat_args = [x]
    for w_p, b_p in zip(weights, biases):
        # Full-array blocks, constant index_map -> weights/biases stay
        # resident in VMEM across all batch-grid steps.
        in_specs.append(pl.BlockSpec(w_p.shape, lambda i: (0, 0)))
        in_specs.append(pl.BlockSpec(b_p.shape, lambda i: (0, 0)))
        flat_args.append(w_p)
        flat_args.append(b_p)
    out_specs = pl.BlockSpec((TB, Dout_p), lambda i: (i, 0))

    # ---- VMEM budget (double-buffered blocks) and explicit scoped limit ----
    wb_bytes = (sum(w.size * w.dtype.itemsize for w in weights)
                + sum(b.size * b.dtype.itemsize for b in biases))
    vmem_est = 2 * wb_bytes + 2 * TB * Din_p * 4 + 2 * TB * Dout_p * 4
    if vmem_est > (56 << 20):
        # TODO(synk): for very large layers, tile the big matmul over its
        # output/K dims (or single-buffer the resident weights) instead of
        # whole-network VMEM residency.
        raise ValueError(f"MLP too large for whole-network VMEM residency "
                         f"(~{vmem_est >> 20} MiB); reduce batch_tile/layers.")
    vmem_limit = int(min(56 << 20, max(16 << 20, 2 * vmem_est)))

    # ---- advisory cost estimate ----
    flops = sum(2 * Bp * w.shape[0] * w.shape[1] for w in weights)
    bytes_accessed = x.size * 4 + Bp * Dout_p * 4 + wb_bytes

    kernel = functools.partial(_fused_mlp_kernel, num_layers=n_layers)
    out_p = pl.pallas_call(
        kernel,
        out_shape=jax.ShapeDtypeStruct((Bp, Dout_p), jnp.float32),
        grid=grid,
        in_specs=in_specs,
        out_specs=out_specs,
        compiler_params=pltpu.CompilerParams(
            dimension_semantics=("parallel",),   # megacore-shard the batch axis
            vmem_limit_bytes=vmem_limit,
        ),
        cost_estimate=pl.CostEstimate(
            flops=flops, transcendentals=0, bytes_accessed=bytes_accessed),
    )(*flat_args)

    # Strip batch/feature padding.
    return out_p[:B, :out_features]


def mlp_forward(prepped, x, *, batch_tile=256):
    """prepped = prepare_mlp_params(params); x: [N, ...] -> flatten(1) -> MLP."""
    weights, biases, out_features = prepped
    return _mlp_forward_impl(weights, biases, x,
                             out_features=out_features, batch_tile=batch_tile)


def init_mlp_params(key, input_size, hidden_sizes, output_size):
    """Deterministic parameter init mirroring the torch module's layer shapes."""
    sizes = [input_size] + list(hidden_sizes) + [output_size]
    params = []
    for i in range(len(sizes) - 1):
        fan_in, fan_out = sizes[i], sizes[i + 1]
        key, wk, bk = jax.random.split(key, 3)
        bound = 1.0 / jnp.sqrt(jnp.float32(fan_in))
        w = jax.random.uniform(wk, (fan_in, fan_out), jnp.float32, -bound, bound)
        b = jax.random.uniform(bk, (fan_out,), jnp.float32, -bound, bound)
        params.append((w, b))
    return params


def mlp_reference(params, x, operand_dtype=jnp.float32):
    """Pure-JAX reference (optionally with bf16 matmul operands, f32 accumulate)."""
    x = x.reshape(x.shape[0], -1).astype(jnp.float32)
    n_layers = len(params)
    for i, (w, b) in enumerate(params):
        y = jnp.dot(x.astype(operand_dtype), w.astype(operand_dtype),
                    preferred_element_type=jnp.float32) + b.astype(jnp.float32)
        x = jnp.maximum(y, 0.0) if i < n_layers - 1 else y
    return x


if __name__ == "__main__":
    key = jax.random.PRNGKey(0)
    key, xk = jax.random.split(key)

    # Small example consistent with the module: image-like input flattened.
    batch, channels, spatial = 2, 4, 16
    x = jax.random.normal(xk, (batch, channels, spatial, spatial), jnp.float32)

    input_size = channels * spatial * spatial  # 1024
    hidden_sizes = [32, 32]
    output_size = 10

    params = init_mlp_params(key, input_size, hidden_sizes, output_size)
    prepped = prepare_mlp_params(params)       # one-time pad + bf16 cast

    out = mlp_forward(prepped, x)
    out = jax.block_until_ready(out)
    assert out.shape == (batch, output_size), out.shape

    # bf16-operand reference (same precision contract as the kernel) + an f32
    # sanity check with looser tolerances.
    ref_bf16 = mlp_reference(params, x, operand_dtype=jnp.bfloat16)
    ref_f32 = mlp_reference(params, x)
    assert jnp.allclose(out, ref_bf16, atol=1e-2, rtol=1e-2), "mismatch vs bf16 reference"
    assert jnp.allclose(out, ref_f32, atol=1e-1, rtol=1e-1), "mismatch vs f32 reference"

    print("KERNEL_OK")
</pallas_src>

<mosaic_0001>
module attributes {stable_mosaic.version = 11 : i64} {
  func.func @_fused_mlp_kernel(%arg0: i32, %arg1: memref<16x1024xf32, #tpu.memory_space<vmem>>, %arg2: memref<1024x128xbf16, #tpu.memory_space<vmem>>, %arg3: memref<1x128xf32, #tpu.memory_space<vmem>>, %arg4: memref<128x128xbf16, #tpu.memory_space<vmem>>, %arg5: memref<1x128xf32, #tpu.memory_space<vmem>>, %arg6: memref<128x128xbf16, #tpu.memory_space<vmem>>, %arg7: memref<1x128xf32, #tpu.memory_space<vmem>>, %arg8: memref<16x128xf32, #tpu.memory_space<vmem>>) attributes {dimension_semantics = [#tpu.dimension_semantics<parallel>], iteration_bounds = array<i64: 1>, scalar_prefetch = 0 : i64, scratch_operands = 0 : i64, tpu.core_type = #tpu.core_type<tc>, window_params = [{transform_indices = @transform_0, window_bounds = array<i64: 16, 1024>}, {pipeline_mode = #tpu.pipeline_mode<synchronous>, transform_indices = @transform_1, window_bounds = array<i64: 1024, 128>}, {pipeline_mode = #tpu.pipeline_mode<synchronous>, transform_indices = @transform_2, window_bounds = array<i64: 1, 128>}, {pipeline_mode = #tpu.pipeline_mode<synchronous>, transform_indices = @transform_3, window_bounds = array<i64: 128, 128>}, {pipeline_mode = #tpu.pipeline_mode<synchronous>, transform_indices = @transform_4, window_bounds = array<i64: 1, 128>}, {pipeline_mode = #tpu.pipeline_mode<synchronous>, transform_indices = @transform_5, window_bounds = array<i64: 128, 128>}, {pipeline_mode = #tpu.pipeline_mode<synchronous>, transform_indices = @transform_6, window_bounds = array<i64: 1, 128>}, {transform_indices = @transform_7, window_bounds = array<i64: 16, 128>}]} {
    %c0 = arith.constant 0 : index
    %c0_0 = arith.constant 0 : index
    %0 = vector.load %arg1[%c0, %c0_0] : memref<16x1024xf32, #tpu.memory_space<vmem>>, vector<16x1024xf32>
    %c0_1 = arith.constant 0 : index
    %c0_2 = arith.constant 0 : index
    %1 = vector.load %arg2[%c0_1, %c0_2] : memref<1024x128xbf16, #tpu.memory_space<vmem>>, vector<1024x128xbf16>
    %c0_3 = arith.constant 0 : index
    %c0_4 = arith.constant 0 : index
    %2 = vector.load %arg3[%c0_3, %c0_4] : memref<1x128xf32, #tpu.memory_space<vmem>>, vector<1x128xf32>
    %3 = arith.truncf %0 : vector<16x1024xf32> to vector<16x1024xbf16>
    %cst = arith.constant dense<0.000000e+00> : vector<16x128xf32>
    %4 = tpu.matmul %3, %1, %cst {dimension_numbers = #tpu.dot_dimension_numbers<[1], [0], [0], [1], [0, 0, 1, 1], [], []>} : vector<16x1024xbf16>, vector<1024x128xbf16>, vector<16x128xf32> -> vector<16x128xf32>
    %5 = vector.broadcast %2 : vector<1x128xf32> to vector<16x128xf32>
    %6 = arith.addf %5, %4 : vector<16x128xf32>
    %cst_5 = arith.constant 0.000000e+00 : f32
    %7 = vector.broadcast %cst_5 : f32 to vector<16x128xf32>
    %8 = arith.maximumf %6, %7 : vector<16x128xf32>
    %c0_6 = arith.constant 0 : index
    %c0_7 = arith.constant 0 : index
    %9 = vector.load %arg4[%c0_6, %c0_7] : memref<128x128xbf16, #tpu.memory_space<vmem>>, vector<128x128xbf16>
    %c0_8 = arith.constant 0 : index
    %c0_9 = arith.constant 0 : index
    %10 = vector.load %arg5[%c0_8, %c0_9] : memref<1x128xf32, #tpu.memory_space<vmem>>, vector<1x128xf32>
    %11 = arith.truncf %8 : vector<16x128xf32> to vector<16x128xbf16>
    %cst_10 = arith.constant dense<0.000000e+00> : vector<16x128xf32>
    %12 = tpu.matmul %11, %9, %cst_10 {dimension_numbers = #tpu.dot_dimension_numbers<[1], [0], [0], [1], [0, 0, 1, 1], [], []>} : vector<16x128xbf16>, vector<128x128xbf16>, vector<16x128xf32> -> vector<16x128xf32>
    %13 = vector.broadcast %10 : vector<1x128xf32> to vector<16x128xf32>
    %14 = arith.addf %13, %12 : vector<16x128xf32>
    %cst_11 = arith.constant 0.000000e+00 : f32
    %15 = vector.broadcast %cst_11 : f32 to vector<16x128xf32>
    %16 = arith.maximumf %14, %15 : vector<16x128xf32>
    %c0_12 = arith.constant 0 : index
    %c0_13 = arith.constant 0 : index
    %17 = vector.load %arg6[%c0_12, %c0_13] : memref<128x128xbf16, #tpu.memory_space<vmem>>, vector<128x128xbf16>
    %c0_14 = arith.constant 0 : index
    %c0_15 = arith.constant 0 : index
    %18 = vector.load %arg7[%c0_14, %c0_15] : memref<1x128xf32, #tpu.memory_space<vmem>>, vector<1x128xf32>
    %19 = arith.truncf %16 : vector<16x128xf32> to vector<16x128xbf16>
    %cst_16 = arith.constant dense<0.000000e+00> : vector<16x128xf32>
    %20 = tpu.matmul %19, %17, %cst_16 {dimension_numbers = #tpu.dot_dimension_numbers<[1], [0], [0], [1], [0, 0, 1, 1], [], []>} : vector<16x128xbf16>, vector<128x128xbf16>, vector<16x128xf32> -> vector<16x128xf32>
    %21 = vector.broadcast %18 : vector<1x128xf32> to vector<16x128xf32>
    %22 = arith.addf %21, %20 : vector<16x128xf32>
    %c0_17 = arith.constant 0 : index
    %c0_18 = arith.constant 0 : index
    %23 = vector.load %arg8[%c0_17, %c0_18] : memref<16x128xf32, #tpu.memory_space<vmem>>, vector<16x128xf32>
    tpu.vector_store %arg8[%c0_17, %c0_18], %22 {strides = array<i32>} : memref<16x128xf32, #tpu.memory_space<vmem>>, vector<16x128xf32>,
    return
  }
  func.func @transform_0(%arg0: i32) -> (i32, i32) {
    %c0_i32 = arith.constant 0 : i32
    %c0_i32_0 = arith.constant 0 : i32
    return %arg0, %c0_i32 : i32, i32
  }
  func.func @transform_1(%arg0: i32) -> (i32, i32) {
    %c0_i32 = arith.constant 0 : i32
    %c0_i32_0 = arith.constant 0 : i32
    %c0_i32_1 = arith.constant 0 : i32
    return %c0_i32, %c0_i32_0 : i32, i32
  }
  func.func @transform_2(%arg0: i32) -> (i32, i32) {
    %c0_i32 = arith.constant 0 : i32
    %c0_i32_0 = arith.constant 0 : i32
    %c0_i32_1 = arith.constant 0 : i32
    return %c0_i32, %c0_i32_0 : i32, i32
  }
  func.func @transform_3(%arg0: i32) -> (i32, i32) {
    %c0_i32 = arith.constant 0 : i32
    %c0_i32_0 = arith.constant 0 : i32
    %c0_i32_1 = arith.constant 0 : i32
    return %c0_i32, %c0_i32_0 : i32, i32
  }
  func.func @transform_4(%arg0: i32) -> (i32, i32) {
    %c0_i32 = arith.constant 0 : i32
    %c0_i32_0 = arith.constant 0 : i32
    %c0_i32_1 = arith.constant 0 : i32
    return %c0_i32, %c0_i32_0 : i32, i32
  }
  func.func @transform_5(%arg0: i32) -> (i32, i32) {
    %c0_i32 = arith.constant 0 : i32
    %c0_i32_0 = arith.constant 0 : i32
    %c0_i32_1 = arith.constant 0 : i32
    return %c0_i32, %c0_i32_0 : i32, i32
  }
  func.func @transform_6(%arg0: i32) -> (i32, i32) {
    %c0_i32 = arith.constant 0 : i32
    %c0_i32_0 = arith.constant 0 : i32
    %c0_i32_1 = arith.constant 0 : i32
    return %c0_i32, %c0_i32_0 : i32, i32
  }
  func.func @transform_7(%arg0: i32) -> (i32, i32) {
    %c0_i32 = arith.constant 0 : i32
    %c0_i32_0 = arith.constant 0 : i32
    return %arg0, %c0_i32 : i32, i32
  }
}

</mosaic_0001>

<llo_original>
// kernel: _mlp_forward_impl.1
$region0: #{_mlp_forward_impl.1}
  #allocation0 [shape = 'u32[]', space=smem, size = 0x4, offset = 0x4, fixed_abs, tag = 'smem constant byte address 0x4 - core index']
  #allocation1 [shape = 'u32[144,128]{1,0:T(1,128)}', space=vmem, size = 0x12000, scoped, tag = 'internal scratch']
  %s0 = inlined_call_operand.vmem [shape: f32[16,1024], index: 0, kind: input, shape index: {}]
  %s1 = inlined_call_operand.hbm [shape: bf16[1024,128], index: 1, kind: input, shape index: {}]
  %s2 = inlined_call_operand.vmem [shape: f32[1,128], index: 2, kind: input, shape index: {}]
  %s3 = inlined_call_operand.vmem [shape: bf16[128,128], index: 3, kind: input, shape index: {}]
  %s4 = inlined_call_operand.vmem [shape: f32[1,128], index: 4, kind: input, shape index: {}]
  %s5 = inlined_call_operand.vmem [shape: bf16[128,128], index: 5, kind: input, shape index: {}]
  %s6 = inlined_call_operand.vmem [shape: f32[1,128], index: 6, kind: input, shape index: {}]
  %s7 = inlined_call_operand.vmem [shape: f32[16,128], index: 7, kind: output, shape index: {}]
  %s8 = sld [smem:[#allocation0]]
  $region42: #{_mlp_forward_impl.1} parent=0
    _
  %s10 = ssub.s32 1, %s8
  %s11 = scalar_select 0, %s10, %s8
  $region1: #{_mlp_forward_impl.1} parent=0
    #allocation2 [shape = 'u8[262144]{0}', space=vmem, size = 0x40000, scoped, tag = 'input window, operand 1, single buffered']
    #allocation3 [shape = 's32[1]{0}', space=sflag, size = 0x4, scoped, tag = 'scoped memory for _mlp_forward_impl.1']
    %12 = vsyncpa [#allocation3], 0
    // Predicated region
    $region2: #{_mlp_forward_impl.1} parent=1 // pred_check
      _
    $region3: #{_mlp_forward_impl.1} parent=1 // pred_check_branch
      %14 = sbr.rel (0) target = $region5
    $region4: #{_mlp_forward_impl.1} parent=1 // pred_region
      _
    $region5: #{_mlp_forward_impl.1} parent=1 // pred_fallthru
      _
    // Predicated region
    $region6: #{_mlp_forward_impl.1} parent=1 // pred_check
      _
    $region7: #{_mlp_forward_impl.1} parent=1 // pred_check_branch
      %16 = sbr.rel (0) target = $region9
    $region8: #{_mlp_forward_impl.1} parent=1 // pred_region
      %s18 = ssub.s32 8192, 8192
      %19 = vsyncadd [#allocation3], %s18
      %s20 = sshll.u32 [#allocation2], 4
      %s21 = int_to_ptr.vmem [resolvable:$true] %s20
      %26 = dma.hbm_to_vmem [thread:$0]  %s1, 8192, %s21, [#allocation3], 64, 64, 4
    $region9: #{_mlp_forward_impl.1} parent=1 // pred_fallthru
      _
    // Predicated region
    $region10: #{_mlp_forward_impl.1} parent=1 // pred_check
      _
    $region11: #{_mlp_forward_impl.1} parent=1 // pred_check_branch
      %28 = sbr.rel (0) target = $region13
    $region12: #{_mlp_forward_impl.1} parent=1 // pred_region
      _
    $region13: #{_mlp_forward_impl.1} parent=1 // pred_fallthru
      _
    // Predicated region
    $region14: #{_mlp_forward_impl.1} parent=1 // pred_check
      _
    $region15: #{_mlp_forward_impl.1} parent=1 // pred_check_branch
      %30 = sbr.rel (0) target = $region17
    $region16: #{_mlp_forward_impl.1} parent=1 // pred_region
      _
    $region17: #{_mlp_forward_impl.1} parent=1 // pred_fallthru
      _
    // Predicated region
    $region18: #{_mlp_forward_impl.1} parent=1 // pred_check
      _
    $region19: #{_mlp_forward_impl.1} parent=1 // pred_check_branch
      %32 = sbr.rel (0) target = $region21
    $region20: #{_mlp_forward_impl.1} parent=1 // pred_region
      _
    $region21: #{_mlp_forward_impl.1} parent=1 // pred_fallthru
      _
    // Predicated region
    $region22: #{_mlp_forward_impl.1} parent=1 // pred_check
      _
    $region23: #{_mlp_forward_impl.1} parent=1 // pred_check_branch
      %34 = sbr.rel (0) target = $region25
    $region24: #{_mlp_forward_impl.1} parent=1 // pred_region
      _
    $region25: #{_mlp_forward_impl.1} parent=1 // pred_fallthru
      _
    // Predicated region
    $region26: #{_mlp_forward_impl.1} parent=1 // pred_check
      _
    $region27: #{_mlp_forward_impl.1} parent=1 // pred_check_branch
      %36 = sbr.rel (0) target = $region29
    $region28: #{_mlp_forward_impl.1} parent=1 // pred_region
      _
    $region29: #{_mlp_forward_impl.1} parent=1 // pred_fallthru
      _
    // Predicated region
    $region30: #{_mlp_forward_impl.1} parent=1 // pred_check
      _
    $region31: #{_mlp_forward_impl.1} parent=1 // pred_check_branch
      %38 = sbr.rel (0) target = $region33
    $region32: #{_mlp_forward_impl.1} parent=1 // pred_region
      %39 = dma.done [#allocation3], 8192
    $region33: #{_mlp_forward_impl.1} parent=1 // pred_fallthru
      _
    %v41 = vld [vmem:[%s0] sm:$0xff]
    %v42 = vld [vmem:[%s0 + $0x8] sm:$0xff]
    %v43 = vld [vmem:[%s0 + $0x10] sm:$0xff]
    %v44 = vld [vmem:[%s0 + $0x18] sm:$0xff]
    %v45 = vld [vmem:[%s0 + $0x20] sm:$0xff]
    %v46 = vld [vmem:[%s0 + $0x28] sm:$0xff]
    %v47 = vld [vmem:[%s0 + $0x30] sm:$0xff]
    %v48 = vld [vmem:[%s0 + $0x38] sm:$0xff]
    %v49 = vld [vmem:[%s0 + $0x40] sm:$0xff]
    %v50 = vld [vmem:[%s0 + $0x48] sm:$0xff]
    %v51 = vld [vmem:[%s0 + $0x50] sm:$0xff]
    %v52 = vld [vmem:[%s0 + $0x58] sm:$0xff]
    %v53 = vld [vmem:[%s0 + $0x60] sm:$0xff]
    %v54 = vld [vmem:[%s0 + $0x68] sm:$0xff]
    %v55 = vld [vmem:[%s0 + $0x70] sm:$0xff]
    %v56 = vld [vmem:[%s0 + $0x78] sm:$0xff]
    %v57 = vld [vmem:[#allocation2] sm:$0xf]
    %v58 = vld [vmem:[#allocation2 + $0x4] sm:$0xf]
    %v59 = vld [vmem:[#allocation2 + $0x8] sm:$0xf]
    %v60 = vld [vmem:[#allocation2 + $0xc] sm:$0xf]
    %v61 = vld [vmem:[#allocation2 + $0x10] sm:$0xf]
    %v62 = vld [vmem:[#allocation2 + $0x14] sm:$0xf]
    %v63 = vld [vmem:[#allocation2 + $0x18] sm:$0xf]
    %v64 = vld [vmem:[#allocation2 + $0x1c] sm:$0xf]
    %v65 = vld [vmem:[#allocation2 + $0x20] sm:$0xf]
    %v66 = vld [vmem:[#allocation2 + $0x24] sm:$0xf]
    %v67 = vld [vmem:[#allocation2 + $0x28] sm:$0xf]
    %v68 = vld [vmem:[#allocation2 + $0x2c] sm:$0xf]
    %v69 = vld [vmem:[#allocation2 + $0x30] sm:$0xf]
    %v70 = vld [vmem:[#allocation2 + $0x34] sm:$0xf]
    %v71 = vld [vmem:[#allocation2 + $0x38] sm:$0xf]
    %v72 = vld [vmem:[#allocation2 + $0x3c] sm:$0xf]
    %v73 = vld [vmem:[#allocation2 + $0x40] sm:$0xf]
    %v74 = vld [vmem:[#allocation2 + $0x44] sm:$0xf]
    %v75 = vld [vmem:[#allocation2 + $0x48] sm:$0xf]
    %v76 = vld [vmem:[#allocation2 + $0x4c] sm:$0xf]
    %v77 = vld [vmem:[#allocation2 + $0x50] sm:$0xf]
    %v78 = vld [vmem:[#allocation2 + $0x54] sm:$0xf]
    %v79 = vld [vmem:[#allocation2 + $0x58] sm:$0xf]
    %v80 = vld [vmem:[#allocation2 + $0x5c] sm:$0xf]
    %v81 = vld [vmem:[#allocation2 + $0x60] sm:$0xf]
    %v82 = vld [vmem:[#allocation2 + $0x64] sm:$0xf]
    %v83 = vld [vmem:[#allocation2 + $0x68] sm:$0xf]
    %v84 = vld [vmem:[#allocation2 + $0x6c] sm:$0xf]
    %v85 = vld [vmem:[#allocation2 + $0x70] sm:$0xf]
    %v86 = vld [vmem:[#allocation2 + $0x74] sm:$0xf]
    %v87 = vld [vmem:[#allocation2 + $0x78] sm:$0xf]
    %v88 = vld [vmem:[#allocation2 + $0x7c] sm:$0xf]
    %v89 = vld [vmem:[#allocation2 + $0x80] sm:$0xf]
    %v90 = vld [vmem:[#allocation2 + $0x84] sm:$0xf]
    %v91 = vld [vmem:[#allocation2 + $0x88] sm:$0xf]
    %v92 = vld [vmem:[#allocation2 + $0x8c] sm:$0xf]
    %v93 = vld [vmem:[#allocation2 + $0x90] sm:$0xf]
    %v94 = vld [vmem:[#allocation2 + $0x94] sm:$0xf]
    %v95 = vld [vmem:[#allocation2 + $0x98] sm:$0xf]
    %v96 = vld [vmem:[#allocation2 + $0x9c] sm:$0xf]
    %v97 = vld [vmem:[#allocation2 + $0xa0] sm:$0xf]
    %v98 = vld [vmem:[#allocation2 + $0xa4] sm:$0xf]
    %v99 = vld [vmem:[#allocation2 + $0xa8] sm:$0xf]
    %v100 = vld [vmem:[#allocation2 + $0xac] sm:$0xf]
    %v101 = vld [vmem:[#allocation2 + $0xb0] sm:$0xf]
    %v102 = vld [vmem:[#allocation2 + $0xb4] sm:$0xf]
    %v103 = vld [vmem:[#allocation2 + $0xb8] sm:$0xf]
    %v104 = vld [vmem:[#allocation2 + $0xbc] sm:$0xf]
    %v105 = vld [vmem:[#allocation2 + $0xc0] sm:$0xf]
    %v106 = vld [vmem:[#allocation2 + $0xc4] sm:$0xf]
    %v107 = vld [vmem:[#allocation2 + $0xc8] sm:$0xf]
    %v108 = vld [vmem:[#allocation2 + $0xcc] sm:$0xf]
    %v109 = vld [vmem:[#allocation2 + $0xd0] sm:$0xf]
    %v110 = vld [vmem:[#allocation2 + $0xd4] sm:$0xf]
    %v111 = vld [vmem:[#allocation2 + $0xd8] sm:$0xf]
    %v112 = vld [vmem:[#allocation2 + $0xdc] sm:$0xf]
    %v113 = vld [vmem:[#allocation2 + $0xe0] sm:$0xf]
    %v114 = vld [vmem:[#allocation2 + $0xe4] sm:$0xf]
    %v115 = vld [vmem:[#allocation2 + $0xe8] sm:$0xf]
    %v116 = vld [vmem:[#allocation2 + $0xec] sm:$0xf]
    %v117 = vld [vmem:[#allocation2 + $0xf0] sm:$0xf]
    %v118 = vld [vmem:[#allocation2 + $0xf4] sm:$0xf]
    %v119 = vld [vmem:[#allocation2 + $0xf8] sm:$0xf]
    %v120 = vld [vmem:[#allocation2 + $0xfc] sm:$0xf]
    %v121 = vld [vmem:[#allocation2 + $0x100] sm:$0xf]
    %v122 = vld [vmem:[#allocation2 + $0x104] sm:$0xf]
    %v123 = vld [vmem:[#allocation2 + $0x108] sm:$0xf]
    %v124 = vld [vmem:[#allocation2 + $0x10c] sm:$0xf]
    %v125 = vld [vmem:[#allocation2 + $0x110] sm:$0xf]
    %v126 = vld [vmem:[#allocation2 + $0x114] sm:$0xf]
    %v127 = vld [vmem:[#allocation2 + $0x118] sm:$0xf]
    %v128 = vld [vmem:[#allocation2 + $0x11c] sm:$0xf]
    %v129 = vld [vmem:[#allocation2 + $0x120] sm:$0xf]
    %v130 = vld [vmem:[#allocation2 + $0x124] sm:$0xf]
    %v131 = vld [vmem:[#allocation2 + $0x128] sm:$0xf]
    %v132 = vld [vmem:[#allocation2 + $0x12c] sm:$0xf]
    %v133 = vld [vmem:[#allocation2 + $0x130] sm:$0xf]
    %v134 = vld [vmem:[#allocation2 + $0x134] sm:$0xf]
    %v135 = vld [vmem:[#allocation2 + $0x138] sm:$0xf]
    %v136 = vld [vmem:[#allocation2 + $0x13c] sm:$0xf]
    %v137 = vld [vmem:[#allocation2 + $0x140] sm:$0xf]
    %v138 = vld [vmem:[#allocation2 + $0x144] sm:$0xf]
    %v139 = vld [vmem:[#allocation2 + $0x148] sm:$0xf]
    %v140 = vld [vmem:[#allocation2 + $0x14c] sm:$0xf]
    %v141 = vld [vmem:[#allocation2 + $0x150] sm:$0xf]
    %v142 = vld [vmem:[#allocation2 + $0x154] sm:$0xf]
    %v143 = vld [vmem:[#allocation2 + $0x158] sm:$0xf]
    %v144 = vld [vmem:[#allocation2 + $0x15c] sm:$0xf]
    %v145 = vld [vmem:[#allocation2 + $0x160] sm:$0xf]
    %v146 = vld [vmem:[#allocation2 + $0x164] sm:$0xf]
    %v147 = vld [vmem:[#allocation2 + $0x168] sm:$0xf]
    %v148 = vld [vmem:[#allocation2 + $0x16c] sm:$0xf]
    %v149 = vld [vmem:[#allocation2 + $0x170] sm:$0xf]
    %v150 = vld [vmem:[#allocation2 + $0x174] sm:$0xf]
    %v151 = vld [vmem:[#allocation2 + $0x178] sm:$0xf]
    %v152 = vld [vmem:[#allocation2 + $0x17c] sm:$0xf]
    %v153 = vld [vmem:[#allocation2 + $0x180] sm:$0xf]
    %v154 = vld [vmem:[#allocation2 + $0x184] sm:$0xf]
    %v155 = vld [vmem:[#allocation2 + $0x188] sm:$0xf]
    %v156 = vld [vmem:[#allocation2 + $0x18c] sm:$0xf]
    %v157 = vld [vmem:[#allocation2 + $0x190] sm:$0xf]
    %v158 = vld [vmem:[#allocation2 + $0x194] sm:$0xf]
    %v159 = vld [vmem:[#allocation2 + $0x198] sm:$0xf]
    %v160 = vld [vmem:[#allocation2 + $0x19c] sm:$0xf]
    %v161 = vld [vmem:[#allocation2 + $0x1a0] sm:$0xf]
    %v162 = vld [vmem:[#allocation2 + $0x1a4] sm:$0xf]
    %v163 = vld [vmem:[#allocation2 + $0x1a8] sm:$0xf]
    %v164 = vld [vmem:[#allocation2 + $0x1ac] sm:$0xf]
    %v165 = vld [vmem:[#allocation2 + $0x1b0] sm:$0xf]
    %v166 = vld [vmem:[#allocation2 + $0x1b4] sm:$0xf]
    %v167 = vld [vmem:[#allocation2 + $0x1b8] sm:$0xf]
    %v168 = vld [vmem:[#allocation2 + $0x1bc] sm:$0xf]
    %v169 = vld [vmem:[#allocation2 + $0x1c0] sm:$0xf]
    %v170 = vld [vmem:[#allocation2 + $0x1c4] sm:$0xf]
    %v171 = vld [vmem:[#allocation2 + $0x1c8] sm:$0xf]
    %v172 = vld [vmem:[#allocation2 + $0x1cc] sm:$0xf]
    %v173 = vld [vmem:[#allocation2 + $0x1d0] sm:$0xf]
    %v174 = vld [vmem:[#allocation2 + $0x1d4] sm:$0xf]
    %v175 = vld [vmem:[#allocation2 + $0x1d8] sm:$0xf]
    %v176 = vld [vmem:[#allocation2 + $0x1dc] sm:$0xf]
    %v177 = vld [vmem:[#allocation2 + $0x1e0] sm:$0xf]
    %v178 = vld [vmem:[#allocation2 + $0x1e4] sm:$0xf]
    %v179 = vld [vmem:[#allocation2 + $0x1e8] sm:$0xf]
    %v180 = vld [vmem:[#allocation2 + $0x1ec] sm:$0xf]
    %v181 = vld [vmem:[#allocation2 + $0x1f0] sm:$0xf]
    %v182 = vld [vmem:[#allocation2 + $0x1f4] sm:$0xf]
    %v183 = vld [vmem:[#allocation2 + $0x1f8] sm:$0xf]
    %v184 = vld [vmem:[#allocation2 + $0x1fc] sm:$0xf]
    %v185 = vld [vmem:[%s2] sm:$0x1]
    %v186 = vpack.c.bf16 %v49, %v41
    %v187 = vpack.c.bf16 %v50, %v42
    %v188 = vpack.c.bf16 %v51, %v43
    %v189 = vpack.c.bf16 %v52, %v44
    %v190 = vpack.c.bf16 %v53, %v45
    %v191 = vpack.c.bf16 %v54, %v46
    %v192 = vpack.c.bf16 %v55, %v47
    %v193 = vpack.c.bf16 %v56, %v48
    %v322 = vunpack.c.l.b16 %v57
    %v323 = vunpack.c.l.b16 %v58
    %v324 = vunpack.c.l.b16 %v59
    %v325 = vunpack.c.l.b16 %v60
    %v326 = vunpack.c.l.b16 %v61
    %v327 = vunpack.c.l.b16 %v62
    %v328 = vunpack.c.l.b16 %v63
    %v329 = vunpack.c.l.b16 %v64
    %v330 = vunpack.c.l.b16 %v65
    %v331 = vunpack.c.l.b16 %v66
    %v332 = vunpack.c.l.b16 %v67
    %v333 = vunpack.c.l.b16 %v68
    %v334 = vunpack.c.l.b16 %v69
    %v335 = vunpack.c.l.b16 %v70
    %v336 = vunpack.c.l.b16 %v71
    %v337 = vunpack.c.l.b16 %v72
    %v338 = vunpack.c.l.b16 %v73
    %v339 = vunpack.c.l.b16 %v74
    %v340 = vunpack.c.l.b16 %v75
    %v341 = vunpack.c.l.b16 %v76
    %v342 = vunpack.c.l.b16 %v77
    %v343 = vunpack.c.l.b16 %v78
    %v344 = vunpack.c.l.b16 %v79
    %v345 = vunpack.c.l.b16 %v80
    %v346 = vunpack.c.l.b16 %v81
    %v347 = vunpack.c.l.b16 %v82
    %v348 = vunpack.c.l.b16 %v83
    %v349 = vunpack.c.l.b16 %v84
    %v350 = vunpack.c.l.b16 %v85
    %v351 = vunpack.c.l.b16 %v86
    %v352 = vunpack.c.l.b16 %v87
    %v353 = vunpack.c.l.b16 %v88
    %v354 = vunpack.c.l.b16 %v89
    %v355 = vunpack.c.l.b16 %v90
    %v356 = vunpack.c.l.b16 %v91
    %v357 = vunpack.c.l.b16 %v92
    %v358 = vunpack.c.l.b16 %v93
    %v359 = vunpack.c.l.b16 %v94
    %v360 = vunpack.c.l.b16 %v95
    %v361 = vunpack.c.l.b16 %v96
    %v362 = vunpack.c.l.b16 %v97
    %v363 = vunpack.c.l.b16 %v98
    %v364 = vunpack.c.l.b16 %v99
    %v365 = vunpack.c.l.b16 %v100
    %v366 = vunpack.c.l.b16 %v101
    %v367 = vunpack.c.l.b16 %v102
    %v368 = vunpack.c.l.b16 %v103
    %v369 = vunpack.c.l.b16 %v104
    %v370 = vunpack.c.l.b16 %v105
    %v371 = vunpack.c.l.b16 %v106
    %v372 = vunpack.c.l.b16 %v107
    %v373 = vunpack.c.l.b16 %v108
    %v374 = vunpack.c.l.b16 %v109
    %v375 = vunpack.c.l.b16 %v110
    %v376 = vunpack.c.l.b16 %v111
    %v377 = vunpack.c.l.b16 %v112
    %v378 = vunpack.c.l.b16 %v113
    %v379 = vunpack.c.l.b16 %v114
    %v380 = vunpack.c.l.b16 %v115
    %v381 = vunpack.c.l.b16 %v116
    %v382 = vunpack.c.l.b16 %v117
    %v383 = vunpack.c.l.b16 %v118
    %v384 = vunpack.c.l.b16 %v119
    %v385 = vunpack.c.l.b16 %v120
    %v386 = vunpack.c.l.b16 %v121
    %v387 = vunpack.c.l.b16 %v122
    %v388 = vunpack.c.l.b16 %v123
    %v389 = vunpack.c.l.b16 %v124
    %v390 = vunpack.c.l.b16 %v125
    %v391 = vunpack.c.l.b16 %v126
    %v392 = vunpack.c.l.b16 %v127
    %v393 = vunpack.c.l.b16 %v128
    %v394 = vunpack.c.l.b16 %v129
    %v395 = vunpack.c.l.b16 %v130
    %v396 = vunpack.c.l.b16 %v131
    %v397 = vunpack.c.l.b16 %v132
    %v398 = vunpack.c.l.b16 %v133
    %v399 = vunpack.c.l.b16 %v134
    %v400 = vunpack.c.l.b16 %v135
    %v401 = vunpack.c.l.b16 %v136
    %v402 = vunpack.c.l.b16 %v137
    %v403 = vunpack.c.l.b16 %v138
    %v404 = vunpack.c.l.b16 %v139
    %v405 = vunpack.c.l.b16 %v140
    %v406 = vunpack.c.l.b16 %v141
    %v407 = vunpack.c.l.b16 %v142
    %v408 = vunpack.c.l.b16 %v143
    %v409 = vunpack.c.l.b16 %v144
    %v410 = vunpack.c.l.b16 %v145
    %v411 = vunpack.c.l.b16 %v146
    %v412 = vunpack.c.l.b16 %v147
    %v413 = vunpack.c.l.b16 %v148
    %v414 = vunpack.c.l.b16 %v149
    %v415 = vunpack.c.l.b16 %v150
    %v416 = vunpack.c.l.b16 %v151
    %v417 = vunpack.c.l.b16 %v152
    %v418 = vunpack.c.l.b16 %v153
    %v419 = vunpack.c.l.b16 %v154
    %v420 = vunpack.c.l.b16 %v155
    %v421 = vunpack.c.l.b16 %v156
    %v422 = vunpack.c.l.b16 %v157
    %v423 = vunpack.c.l.b16 %v158
    %v424 = vunpack.c.l.b16 %v159
    %v425 = vunpack.c.l.b16 %v160
    %v426 = vunpack.c.l.b16 %v161
    %v427 = vunpack.c.l.b16 %v162
    %v428 = vunpack.c.l.b16 %v163
    %v429 = vunpack.c.l.b16 %v164
    %v430 = vunpack.c.l.b16 %v165
    %v431 = vunpack.c.l.b16 %v166
    %v432 = vunpack.c.l.b16 %v167
    %v433 = vunpack.c.l.b16 %v168
    %v434 = vunpack.c.l.b16 %v169
    %v435 = vunpack.c.l.b16 %v170
    %v436 = vunpack.c.l.b16 %v171
    %v437 = vunpack.c.l.b16 %v172
    %v438 = vunpack.c.l.b16 %v173
    %v439 = vunpack.c.l.b16 %v174
    %v440 = vunpack.c.l.b16 %v175
    %v441 = vunpack.c.l.b16 %v176
    %v442 = vunpack.c.l.b16 %v177
    %v443 = vunpack.c.l.b16 %v178
    %v444 = vunpack.c.l.b16 %v179
    %v445 = vunpack.c.l.b16 %v180
    %v446 = vunpack.c.l.b16 %v181
    %v447 = vunpack.c.l.b16 %v182
    %v448 = vunpack.c.l.b16 %v183
    %v449 = vunpack.c.l.b16 %v184
    %v450 = vpack.c.b16 %v323, %v322
    %v451 = vpack.c.b16 %v325, %v324
    %v452 = vpack.c.b16 %v327, %v326
    %v453 = vpack.c.b16 %v329, %v328
    %v454 = vpack.c.b16 %v331, %v330
    %v455 = vpack.c.b16 %v333, %v332
    %v456 = vpack.c.b16 %v335, %v334
    %v457 = vpack.c.b16 %v337, %v336
    %v458 = vpack.c.b16 %v339, %v338
    %v459 = vpack.c.b16 %v341, %v340
    %v460 = vpack.c.b16 %v343, %v342
    %v461 = vpack.c.b16 %v345, %v344
    %v462 = vpack.c.b16 %v347, %v346
    %v463 = vpack.c.b16 %v349, %v348
    %v464 = vpack.c.b16 %v351, %v350
    %v465 = vpack.c.b16 %v353, %v352
    %v466 = vpack.c.b16 %v355, %v354
    %v467 = vpack.c.b16 %v357, %v356
    %v468 = vpack.c.b16 %v359, %v358
    %v469 = vpack.c.b16 %v361, %v360
    %v470 = vpack.c.b16 %v363, %v362
    %v471 = vpack.c.b16 %v365, %v364
    %v472 = vpack.c.b16 %v367, %v366
    %v473 = vpack.c.b16 %v369, %v368
    %v474 = vpack.c.b16 %v371, %v370
    %v475 = vpack.c.b16 %v373, %v372
    %v476 = vpack.c.b16 %v375, %v374
    %v477 = vpack.c.b16 %v377, %v376
    %v478 = vpack.c.b16 %v379, %v378
    %v479 = vpack.c.b16 %v381, %v380
    %v480 = vpack.c.b16 %v383, %v382
    %v481 = vpack.c.b16 %v385, %v384
    %v482 = vpack.c.b16 %v387, %v386
    %v483 = vpack.c.b16 %v389, %v388
    %v484 = vpack.c.b16 %v391, %v390
    %v485 = vpack.c.b16 %v393, %v392
    %v486 = vpack.c.b16 %v395, %v394
    %v487 = vpack.c.b16 %v397, %v396
    %v488 = vpack.c.b16 %v399, %v398
    %v489 = vpack.c.b16 %v401, %v400
    %v490 = vpack.c.b16 %v403, %v402
    %v491 = vpack.c.b16 %v405, %v404
    %v492 = vpack.c.b16 %v407, %v406
    %v493 = vpack.c.b16 %v409, %v408
    %v494 = vpack.c.b16 %v411, %v410
    %v495 = vpack.c.b16 %v413, %v412
    %v496 = vpack.c.b16 %v415, %v414
    %v497 = vpack.c.b16 %v417, %v416
    %v498 = vpack.c.b16 %v419, %v418
    %v499 = vpack.c.b16 %v421, %v420
    %v500 = vpack.c.b16 %v423, %v422
    %v501 = vpack.c.b16 %v425, %v424
    %v502 = vpack.c.b16 %v427, %v426
    %v503 = vpack.c.b16 %v429, %v428
    %v504 = vpack.c.b16 %v431, %v430
    %v505 = vpack.c.b16 %v433, %v432
    %v506 = vpack.c.b16 %v435, %v434
    %v507 = vpack.c.b16 %v437, %v436
    %v508 = vpack.c.b16 %v439, %v438
    %v509 = vpack.c.b16 %v441, %v440
    %v510 = vpack.c.b16 %v443, %v442
    %v511 = vpack.c.b16 %v445, %v444
    %v512 = vpack.c.b16 %v447, %v446
    %v513 = vpack.c.b16 %v449, %v448
    %578 = vmatprep.subr.bf16.mxu0 0
    %579 = vmatpush1.bf16.msra.mxu0 %v450
    %580 = vmatprep.subr.bf16.mxu0 0
    %581 = vmatpush1.bf16.msra.mxu0 %v451
    %582 = vmatprep.subr.bf16.mxu0 0
    %583 = vmatpush1.bf16.msra.mxu0 %v452
    %584 = vmatprep.subr.bf16.mxu0 0
    %585 = vmatpush1.bf16.msra.mxu0 %v453
    %586 = vmatprep.subr.bf16.mxu0 0
    %587 = vmatpush1.bf16.msra.mxu0 %v454
    %588 = vmatprep.subr.bf16.mxu0 0
    %589 = vmatpush1.bf16.msra.mxu0 %v455
    %590 = vmatprep.subr.bf16.mxu0 0
    %591 = vmatpush1.bf16.msra.mxu0 %v456
    %592 = vmatprep.subr.bf16.mxu0 0
    %593 = vmatpush1.bf16.msra.mxu0 %v457
    %594 = vmatprep.subr.bf16.mxu0 0
    %595 = vmatpush1.bf16.msra.mxu0 %v458
    %596 = vmatprep.subr.bf16.mxu0 0
    %597 = vmatpush1.bf16.msra.mxu0 %v459
    %598 = vmatprep.subr.bf16.mxu0 0
    %599 = vmatpush1.bf16.msra.mxu0 %v460
    %600 = vmatprep.subr.bf16.mxu0 0
    %601 = vmatpush1.bf16.msra.mxu0 %v461
    %602 = vmatprep.subr.bf16.mxu0 0
    %603 = vmatpush1.bf16.msra.mxu0 %v462
    %604 = vmatprep.subr.bf16.mxu0 0
    %605 = vmatpush1.bf16.msra.mxu0 %v463
    %606 = vmatprep.subr.bf16.mxu0 0
    %607 = vmatpush1.bf16.msra.mxu0 %v464
    %608 = vmatprep.subr.bf16.mxu0 0
    %609 = vmatpush1.bf16.msra.mxu0 %v465
    %610 = vmatprep.mubr.bf16.mxu0 %v187
    %611 = vmatmul.mubr.bf16.gmra.mrb[0].mxu0 %v186
    %v612 = vpop.f32.mrb[0].mxu0
    %v613 = vadd.f32 0.0, %v612
    %v614 = vpop.f32.mrb[0].mxu0
    %v615 = vpop.f32.mrb[0].mxu0
    %v616 = vadd.f32 0.0, %v615
    %v617 = vpop.f32.mrb[0].mxu0
    %618 = vdwg.mxu0
    %619 = vmatprep.subr.bf16.mxu0 0
    %620 = vmatpush1.bf16.msra.mxu0 %v466
    %621 = vmatprep.subr.bf16.mxu0 0
    %622 = vmatpush1.bf16.msra.mxu0 %v467
    %623 = vmatprep.subr.bf16.mxu0 0
    %624 = vmatpush1.bf16.msra.mxu0 %v468
    %625 = vmatprep.subr.bf16.mxu0 0
    %626 = vmatpush1.bf16.msra.mxu0 %v469
    %627 = vmatprep.subr.bf16.mxu0 0
    %628 = vmatpush1.bf16.msra.mxu0 %v470
    %629 = vmatprep.subr.bf16.mxu0 0
    %630 = vmatpush1.bf16.msra.mxu0 %v471
    %631 = vmatprep.subr.bf16.mxu0 0
    %632 = vmatpush1.bf16.msra.mxu0 %v472
    %633 = vmatprep.subr.bf16.mxu0 0
    %634 = vmatpush1.bf16.msra.mxu0 %v473
    %635 = vmatprep.subr.bf16.mxu0 0
    %636 = vmatpush1.bf16.msra.mxu0 %v474
    %637 = vmatprep.subr.bf16.mxu0 0
    %638 = vmatpush1.bf16.msra.mxu0 %v475
    %639 = vmatprep.subr.bf16.mxu0 0
    %640 = vmatpush1.bf16.msra.mxu0 %v476
    %641 = vmatprep.subr.bf16.mxu0 0
    %642 = vmatpush1.bf16.msra.mxu0 %v477
    %643 = vmatprep.subr.bf16.mxu0 0
    %644 = vmatpush1.bf16.msra.mxu0 %v478
    %645 = vmatprep.subr.bf16.mxu0 0
    %646 = vmatpush1.bf16.msra.mxu0 %v479
    %647 = vmatprep.subr.bf16.mxu0 0
    %648 = vmatpush1.bf16.msra.mxu0 %v480
    %649 = vmatprep.subr.bf16.mxu0 0
    %650 = vmatpush1.bf16.msra.mxu0 %v481
    %651 = vmatprep.mubr.bf16.mxu0 %v189
    %652 = vmatmul.mubr.bf16.gmra.mrb[0].mxu0 %v188
    %v653 = vpop.f32.mrb[0].mxu0
    %v654 = vadd.f32 %v613, %v653
    %v655 = vpop.f32.mrb[0].mxu0
    %v656 = vpop.f32.mrb[0].mxu0
    %v657 = vadd.f32 %v616, %v656
    %v658 = vpop.f32.mrb[0].mxu0
    %659 = vdwg.mxu0
    %660 = vmatprep.subr.bf16.mxu0 0
    %661 = vmatpush1.bf16.msra.mxu0 %v482
    %662 = vmatprep.subr.bf16.mxu0 0
    %663 = vmatpush1.bf16.msra.mxu0 %v483
    %664 = vmatprep.subr.bf16.mxu0 0
    %665 = vmatpush1.bf16.msra.mxu0 %v484
    %666 = vmatprep.subr.bf16.mxu0 0
    %667 = vmatpush1.bf16.msra.mxu0 %v485
    %668 = vmatprep.subr.bf16.mxu0 0
    %669 = vmatpush1.bf16.msra.mxu0 %v486
    %670 = vmatprep.subr.bf16.mxu0 0
    %671 = vmatpush1.bf16.msra.mxu0 %v487
    %672 = vmatprep.subr.bf16.mxu0 0
    %673 = vmatpush1.bf16.msra.mxu0 %v488
    %674 = vmatprep.subr.bf16.mxu0 0
    %675 = vmatpush1.bf16.msra.mxu0 %v489
    %676 = vmatprep.subr.bf16.mxu0 0
    %677 = vmatpush1.bf16.msra.mxu0 %v490
    %678 = vmatprep.subr.bf16.mxu0 0
    %679 = vmatpush1.bf16.msra.mxu0 %v491
    %680 = vmatprep.subr.bf16.mxu0 0
    %681 = vmatpush1.bf16.msra.mxu0 %v492
    %682 = vmatprep.subr.bf16.mxu0 0
    %683 = vmatpush1.bf16.msra.mxu0 %v493
    %684 = vmatprep.subr.bf16.mxu0 0
    %685 = vmatpush1.bf16.msra.mxu0 %v494
    %686 = vmatprep.subr.bf16.mxu0 0
    %687 = vmatpush1.bf16.msra.mxu0 %v495
    %688 = vmatprep.subr.bf16.mxu0 0
    %689 = vmatpush1.bf16.msra.mxu0 %v496
    %690 = vmatprep.subr.bf16.mxu0 0
    %691 = vmatpush1.bf16.msra.mxu0 %v497
    %692 = vmatprep.mubr.bf16.mxu0 %v191
    %693 = vmatmul.mubr.bf16.gmra.mrb[0].mxu0 %v190
    %v694 = vpop.f32.mrb[0].mxu0
    %v695 = vadd.f32 %v654, %v694
    %v696 = vpop.f32.mrb[0].mxu0
    %v697 = vpop.f32.mrb[0].mxu0
    %v698 = vadd.f32 %v657, %v697
    %v699 = vpop.f32.mrb[0].mxu0
    %700 = vdwg.mxu0
    %701 = vmatprep.subr.bf16.mxu0 0
    %702 = vmatpush1.bf16.msra.mxu0 %v498
    %703 = vmatprep.subr.bf16.mxu0 0
    %704 = vmatpush1.bf16.msra.mxu0 %v499
    %705 = vmatprep.subr.bf16.mxu0 0
    %706 = vmatpush1.bf16.msra.mxu0 %v500
    %707 = vmatprep.subr.bf16.mxu0 0
    %708 = vmatpush1.bf16.msra.mxu0 %v501
    %709 = vmatprep.subr.bf16.mxu0 0
    %710 = vmatpush1.bf16.msra.mxu0 %v502
    %711 = vmatprep.subr.bf16.mxu0 0
    %712 = vmatpush1.bf16.msra.mxu0 %v503
    %713 = vmatprep.subr.bf16.mxu0 0
    %714 = vmatpush1.bf16.msra.mxu0 %v504
    %715 = vmatprep.subr.bf16.mxu0 0
    %716 = vmatpush1.bf16.msra.mxu0 %v505
    %717 = vmatprep.subr.bf16.mxu0 0
    %718 = vmatpush1.bf16.msra.mxu0 %v506
    %719 = vmatprep.subr.bf16.mxu0 0
    %720 = vmatpush1.bf16.msra.mxu0 %v507
    %721 = vmatprep.subr.bf16.mxu0 0
    %722 = vmatpush1.bf16.msra.mxu0 %v508
    %723 = vmatprep.subr.bf16.mxu0 0
    %724 = vmatpush1.bf16.msra.mxu0 %v509
    %725 = vmatprep.subr.bf16.mxu0 0
    %726 = vmatpush1.bf16.msra.mxu0 %v510
    %727 = vmatprep.subr.bf16.mxu0 0
    %728 = vmatpush1.bf16.msra.mxu0 %v511
    %729 = vmatprep.subr.bf16.mxu0 0
    %730 = vmatpush1.bf16.msra.mxu0 %v512
    %731 = vmatprep.subr.bf16.mxu0 0
    %732 = vmatpush1.bf16.msra.mxu0 %v513
    %733 = vmatprep.mubr.bf16.mxu0 %v193
    %734 = vmatmul.mubr.bf16.gmra.mrb[0].mxu0 %v192
    %v735 = vpop.f32.mrb[0].mxu0
    %v736 = vadd.f32 %v695, %v735
    %v737 = vpop.f32.mrb[0].mxu0
    %v738 = vpop.f32.mrb[0].mxu0
    %v739 = vadd.f32 %v698, %v738
    %v740 = vpop.f32.mrb[0].mxu0
    %741 = vdwg.mxu0
    %v743 = vlaneseq
    %v744 = vshrl.u32 %v743, 7
    %v745 = vsub.s32 0, %v744
    %v746 = vrot.slane %v185, %v745
    %v748 = vadd.f32 %v746, %v736
    %v749 = vadd.f32 %v746, %v739
    %v750 = vmax.f32 %v748, 0.0
    %v751 = vmax.f32 %v749, 0.0
    %v752 = vld [vmem:[%s3] sm:$0xf]
    %v753 = vld [vmem:[%s3 + $0x4] sm:$0xf]
    %v754 = vld [vmem:[%s3 + $0x8] sm:$0xf]
    %v755 = vld [vmem:[%s3 + $0xc] sm:$0xf]
    %v756 = vld [vmem:[%s3 + $0x10] sm:$0xf]
    %v757 = vld [vmem:[%s3 + $0x14] sm:$0xf]
    %v758 = vld [vmem:[%s3 + $0x18] sm:$0xf]
    %v759 = vld [vmem:[%s3 + $0x1c] sm:$0xf]
    %v760 = vld [vmem:[%s3 + $0x20] sm:$0xf]
    %v761 = vld [vmem:[%s3 + $0x24] sm:$0xf]
    %v762 = vld [vmem:[%s3 + $0x28] sm:$0xf]
    %v763 = vld [vmem:[%s3 + $0x2c] sm:$0xf]
    %v764 = vld [vmem:[%s3 + $0x30] sm:$0xf]
    %v765 = vld [vmem:[%s3 + $0x34] sm:$0xf]
    %v766 = vld [vmem:[%s3 + $0x38] sm:$0xf]
    %v767 = vld [vmem:[%s3 + $0x3c] sm:$0xf]
    %v768 = vld [vmem:[%s4] sm:$0x1]
    %v769 = vpack.c.bf16 %v751, %v750
    %v786 = vunpack.c.l.b16 %v752
    %v787 = vunpack.c.l.b16 %v753
    %v788 = vunpack.c.l.b16 %v754
    %v789 = vunpack.c.l.b16 %v755
    %v790 = vunpack.c.l.b16 %v756
    %v791 = vunpack.c.l.b16 %v757
    %v792 = vunpack.c.l.b16 %v758
    %v793 = vunpack.c.l.b16 %v759
    %v794 = vunpack.c.l.b16 %v760
    %v795 = vunpack.c.l.b16 %v761
    %v796 = vunpack.c.l.b16 %v762
    %v797 = vunpack.c.l.b16 %v763
    %v798 = vunpack.c.l.b16 %v764
    %v799 = vunpack.c.l.b16 %v765
    %v800 = vunpack.c.l.b16 %v766
    %v801 = vunpack.c.l.b16 %v767
    %v802 = vpack.c.b16 %v787, %v786
    %v803 = vpack.c.b16 %v789, %v788
    %v804 = vpack.c.b16 %v791, %v790
    %v805 = vpack.c.b16 %v793, %v792
    %v806 = vpack.c.b16 %v795, %v794
    %v807 = vpack.c.b16 %v797, %v796
    %v808 = vpack.c.b16 %v799, %v798
    %v809 = vpack.c.b16 %v801, %v800
    %818 = vmatprep.subr.bf16.mxu0 0
    %819 = vmatpush1.bf16.msra.mxu0 %v802
    %820 = vmatprep.subr.bf16.mxu0 0
    %821 = vmatpush1.bf16.msra.mxu0 %v803
    %822 = vmatprep.subr.bf16.mxu0 0
    %823 = vmatpush1.bf16.msra.mxu0 %v804
    %824 = vmatprep.subr.bf16.mxu0 0
    %825 = vmatpush1.bf16.msra.mxu0 %v805
    %826 = vmatprep.subr.bf16.mxu0 0
    %827 = vmatpush1.bf16.msra.mxu0 %v806
    %828 = vmatprep.subr.bf16.mxu0 0
    %829 = vmatpush1.bf16.msra.mxu0 %v807
    %830 = vmatprep.subr.bf16.mxu0 0
    %831 = vmatpush1.bf16.msra.mxu0 %v808
    %832 = vmatprep.subr.bf16.mxu0 0
    %833 = vmatpush1.bf16.msra.mxu0 %v809
    %834 = vmatprep.subr.bf16.mxu0 0
    %835 = vmatpush1.bf16.msra.mxu0 0
    %836 = vmatprep.subr.bf16.mxu0 0
    %837 = vmatpush1.bf16.msra.mxu0 0
    %838 = vmatprep.subr.bf16.mxu0 0
    %839 = vmatpush1.bf16.msra.mxu0 0
    %840 = vmatprep.subr.bf16.mxu0 0
    %841 = vmatpush1.bf16.msra.mxu0 0
    %842 = vmatprep.subr.bf16.mxu0 0
    %843 = vmatpush1.bf16.msra.mxu0 0
    %844 = vmatprep.subr.bf16.mxu0 0
    %845 = vmatpush1.bf16.msra.mxu0 0
    %846 = vmatprep.subr.bf16.mxu0 0
    %847 = vmatpush1.bf16.msra.mxu0 0
    %848 = vmatprep.subr.bf16.mxu0 0
    %849 = vmatpush1.bf16.msra.mxu0 0
    %850 = vmatprep.mubr.bf16.mxu0 0
    %851 = vmatmul.mubr.bf16.gmra.mrb[0].mxu0 %v769
    %v852 = vpop.f32.mrb[0].mxu0
    %v853 = vadd.f32 0.0, %v852
    %v854 = vpop.f32.mrb[0].mxu0
    %v855 = vpop.f32.mrb[0].mxu0
    %v856 = vadd.f32 0.0, %v855
    %v857 = vpop.f32.mrb[0].mxu0
    %858 = vdwg.mxu0
    %v860 = vlaneseq
    %v861 = vshrl.u32 %v860, 7
    %v862 = vsub.s32 0, %v861
    %v863 = vrot.slane %v768, %v862
    %v865 = vadd.f32 %v863, %v853
    %v866 = vadd.f32 %v863, %v856
    %v867 = vmax.f32 %v865, 0.0
    %v868 = vmax.f32 %v866, 0.0
    %v869 = vld [vmem:[%s5] sm:$0xf]
    %v870 = vld [vmem:[%s5 + $0x4] sm:$0xf]
    %v871 = vld [vmem:[%s5 + $0x8] sm:$0xf]
    %v872 = vld [vmem:[%s5 + $0xc] sm:$0xf]
    %v873 = vld [vmem:[%s5 + $0x10] sm:$0xf]
    %v874 = vld [vmem:[%s5 + $0x14] sm:$0xf]
    %v875 = vld [vmem:[%s5 + $0x18] sm:$0xf]
    %v876 = vld [vmem:[%s5 + $0x1c] sm:$0xf]
    %v877 = vld [vmem:[%s5 + $0x20] sm:$0xf]
    %v878 = vld [vmem:[%s5 + $0x24] sm:$0xf]
    %v879 = vld [vmem:[%s5 + $0x28] sm:$0xf]
    %v880 = vld [vmem:[%s5 + $0x2c] sm:$0xf]
    %v881 = vld [vmem:[%s5 + $0x30] sm:$0xf]
    %v882 = vld [vmem:[%s5 + $0x34] sm:$0xf]
    %v883 = vld [vmem:[%s5 + $0x38] sm:$0xf]
    %v884 = vld [vmem:[%s5 + $0x3c] sm:$0xf]
    %v885 = vld [vmem:[%s6] sm:$0x1]
    %v886 = vpack.c.bf16 %v868, %v867
    %v903 = vunpack.c.l.b16 %v869
    %v904 = vunpack.c.l.b16 %v870
    %v905 = vunpack.c.l.b16 %v871
    %v906 = vunpack.c.l.b16 %v872
    %v907 = vunpack.c.l.b16 %v873
    %v908 = vunpack.c.l.b16 %v874
    %v909 = vunpack.c.l.b16 %v875
    %v910 = vunpack.c.l.b16 %v876
    %v911 = vunpack.c.l.b16 %v877
    %v912 = vunpack.c.l.b16 %v878
    %v913 = vunpack.c.l.b16 %v879
    %v914 = vunpack.c.l.b16 %v880
    %v915 = vunpack.c.l.b16 %v881
    %v916 = vunpack.c.l.b16 %v882
    %v917 = vunpack.c.l.b16 %v883
    %v918 = vunpack.c.l.b16 %v884
    %v919 = vpack.c.b16 %v904, %v903
    %v920 = vpack.c.b16 %v906, %v905
    %v921 = vpack.c.b16 %v908, %v907
    %v922 = vpack.c.b16 %v910, %v909
    %v923 = vpack.c.b16 %v912, %v911
    %v924 = vpack.c.b16 %v914, %v913
    %v925 = vpack.c.b16 %v916, %v915
    %v926 = vpack.c.b16 %v918, %v917
    %935 = vmatprep.subr.bf16.mxu0 0
    %936 = vmatpush1.bf16.msra.mxu0 %v919
    %937 = vmatprep.subr.bf16.mxu0 0
    %938 = vmatpush1.bf16.msra.mxu0 %v920
    %939 = vmatprep.subr.bf16.mxu0 0
    %940 = vmatpush1.bf16.msra.mxu0 %v921
    %941 = vmatprep.subr.bf16.mxu0 0
    %942 = vmatpush1.bf16.msra.mxu0 %v922
    %943 = vmatprep.subr.bf16.mxu0 0
    %944 = vmatpush1.bf16.msra.mxu0 %v923
    %945 = vmatprep.subr.bf16.mxu0 0
    %946 = vmatpush1.bf16.msra.mxu0 %v924
    %947 = vmatprep.subr.bf16.mxu0 0
    %948 = vmatpush1.bf16.msra.mxu0 %v925
    %949 = vmatprep.subr.bf16.mxu0 0
    %950 = vmatpush1.bf16.msra.mxu0 %v926
    %951 = vmatprep.subr.bf16.mxu0 0
    %952 = vmatpush1.bf16.msra.mxu0 0
    %953 = vmatprep.subr.bf16.mxu0 0
    %954 = vmatpush1.bf16.msra.mxu0 0
    %955 = vmatprep.subr.bf16.mxu0 0
    %956 = vmatpush1.bf16.msra.mxu0 0
    %957 = vmatprep.subr.bf16.mxu0 0
    %958 = vmatpush1.bf16.msra.mxu0 0
    %959 = vmatprep.subr.bf16.mxu0 0
    %960 = vmatpush1.bf16.msra.mxu0 0
    %961 = vmatprep.subr.bf16.mxu0 0
    %962 = vmatpush1.bf16.msra.mxu0 0
    %963 = vmatprep.subr.bf16.mxu0 0
    %964 = vmatpush1.bf16.msra.mxu0 0
    %965 = vmatprep.subr.bf16.mxu0 0
    %966 = vmatpush1.bf16.msra.mxu0 0
    %967 = vmatprep.mubr.bf16.mxu0 0
    %968 = vmatmul.mubr.bf16.gmra.mrb[0].mxu0 %v886
    %v969 = vpop.f32.mrb[0].mxu0
    %v970 = vadd.f32 0.0, %v969
    %v971 = vpop.f32.mrb[0].mxu0
    %v972 = vpop.f32.mrb[0].mxu0
    %v973 = vadd.f32 0.0, %v972
    %v974 = vpop.f32.mrb[0].mxu0
    %975 = vdwg.mxu0
    %v977 = vlaneseq
    %v978 = vshrl.u32 %v977, 7
    %v979 = vsub.s32 0, %v978
    %v980 = vrot.slane %v885, %v979
    %v982 = vadd.f32 %v980, %v970
    %v983 = vadd.f32 %v980, %v973
    %984 = vst [vmem:[%s7] sm:$0xff] %v982
    %985 = vst [vmem:[%s7 + $0x8] sm:$0xff] %v983
    // Predicated region
    $region34: #{_mlp_forward_impl.1} parent=1 // pred_check
      _
    $region35: #{_mlp_forward_impl.1} parent=1 // pred_check_branch
      %987 = sbr.rel (0) target = $region37
    $region36: #{_mlp_forward_impl.1} parent=1 // pred_region
      _
    $region37: #{_mlp_forward_impl.1} parent=1 // pred_fallthru
      _
    // Predicated region
    $region38: #{_mlp_forward_impl.1} parent=1 // pred_check
      _
    $region39: #{_mlp_forward_impl.1} parent=1 // pred_check_branch
      %989 = sbr.rel (0) target = $region41
    $region40: #{_mlp_forward_impl.1} parent=1 // pred_region
      _
    $region41: #{_mlp_forward_impl.1} parent=1 // pred_fallthru
      _
    %990 = vsyncpa [#allocation3], 1

</llo_original>
